<compile_context>
chip_gen: v5e
topology: v5e:2x2
jax: 0.10.0
libtpu: 0.0.40
codegen_flags: <defaults>
</compile_context>

<pallas_src>
import jax
import jax.numpy as jnp
from jax.experimental import pallas as pl
from jax.experimental.pallas import tpu as pltpu


def _round_up(x, m):
    return -(-x // m) * m


# ---------------------------------------------------------------------------
# Kernel
# ---------------------------------------------------------------------------
def _make_unet5_kernel(N, matmul_dtype):
    """N: model in/out width (static).  matmul_dtype: MXU input dtype."""

    def kernel(x_ref, w_ref, b_ref, out_ref, h1_ref, h2_ref):
        relu = lambda v: jnp.maximum(v, 0.0)
        mm = matmul_dtype

        def dense(l, act):
            # act: [F, B_tile] (features on sublanes, batch on lanes).
            # Full padded [F, F] weight block: no per-layer sub-slicing, and the
            # zero-padded rows/cols keep padded activation rows exactly zero.
            return jnp.dot(w_ref[l], act.astype(mm),
                           preferred_element_type=jnp.float32) + b_ref[l]

        # fc1: contract the feature axis of the natural [B_tile, N] x block with
        # W1's input axis (q.k^T-style dot_general), so the batch lands on the
        # lane axis without materializing a transpose of x.
        xb = x_ref[...].astype(mm)                                  # [B_tile, N]
        pre1 = jnp.einsum("of,bf->ob", w_ref[0, :, :N], xb,
                          preferred_element_type=jnp.float32) + b_ref[0]

        h1_ref[...] = relu(pre1).astype(h1_ref.dtype)               # skip #1
        h2_ref[...] = relu(dense(1, h1_ref[...])).astype(h2_ref.dtype)  # skip #2
        h3 = relu(dense(2, h2_ref[...]))
        h4 = relu(dense(3, h3))
        h5 = relu(dense(4, h4 + h2_ref[...].astype(jnp.float32)))   # fc5(out+out2)
        out_t = dense(5, h5 + h1_ref[...].astype(jnp.float32))      # fc6(out+out1)

        # out_t: [F, B_tile]; rows >= N are exactly zero.  One small XLU
        # transpose per tile restores the natural [B_tile, N] layout so the
        # HBM store needs no wrapper-side transpose pass.
        out_ref[...] = out_t[:N, :].T.astype(out_ref.dtype)
        # TODO(synk): dropout for alpha > 0 would use pltpu.prng_seed /
        # pltpu.prng_random_bits; the module is used with alpha == 0 (identity).
        # TODO(synk): activation is fixed to ReLU (module default usage).

    return kernel


# ---------------------------------------------------------------------------
# Tiling / VMEM helpers
# ---------------------------------------------------------------------------
def _default_batch_tile(B_pad, per_elt_bytes, fixed_bytes, *,
                        max_tile=8192, vmem_budget=40 << 20):
    """Largest 128-multiple tile that (a) fits the VMEM budget, (b) leaves
    >= 2 grid steps whenever possible (v7x has 2 TensorCores), (c) divides the
    padded batch."""
    budget_cap = max(128, (vmem_budget - fixed_bytes) // max(per_elt_bytes, 1))
    cap = min(max_tile, budget_cap, max(B_pad // 2, 128))
    cap = max(128, cap - cap % 128)
    if B_pad <= cap:
        return B_pad
    for t in range(cap, 127, -128):
        if B_pad % t == 0:
            return t
    return 128


# ---------------------------------------------------------------------------
# Packing (PyTorch-native weights -> uniform padded blocks)
# ---------------------------------------------------------------------------
def pack_params(params, matmul_dtype=jnp.bfloat16):
    """Pack 6 PyTorch-layout layers (w: [out,in], b: [out]) into uniform buffers.

    Every layer shares one zero-padded [F, F] weight slot (F = max fan rounded
    up to 16, covering the bf16 sublane pack and the f32 sublane tile), so the
    kernel never takes non-tile-aligned sub-slices of grid-invariant weights.
    """
    dims = [(params[f"w{i}"].shape[1], params[f"w{i}"].shape[0])
            for i in range(1, 7)]                         # (fan_in, fan_out)
    F = _round_up(max(max(fi, fo) for fi, fo in dims), 16)
    packed_w = jnp.zeros((6, F, F), matmul_dtype)
    packed_b = jnp.zeros((6, F, 1), jnp.float32)
    for l, (fi, fo) in enumerate(dims):
        packed_w = packed_w.at[l, :fo, :fi].set(params[f"w{l + 1}"].astype(matmul_dtype))
        packed_b = packed_b.at[l, :fo, 0].set(params[f"b{l + 1}"].astype(jnp.float32))
    return packed_w, packed_b, dims


# ---------------------------------------------------------------------------
# Wrapper
# ---------------------------------------------------------------------------
def denoising_unet5_forward(x, packed_w, packed_b, dims, *,
                            batch_tile=None, out_dtype=None):
    """x: [B, N] (any float dtype).  packed_w: [6, F, F].  packed_b: [6, F, 1]."""
    B, N = x.shape
    F = packed_w.shape[1]
    assert packed_w.shape == (6, F, F) and packed_b.shape == (6, F, 1)
    assert dims[0][0] == N and dims[-1][1] == N, "first/last layer must match N"
    assert dims[4][1] == dims[0][1] and dims[3][1] == dims[1][1], \
        "skip connections require n_units[4]==n_units[0], n_units[3]==n_units[1]"
    assert N <= F and max(max(d) for d in dims) <= F

    matmul_dtype = packed_w.dtype
    if out_dtype is None:
        out_dtype = x.dtype
    skip_dtype = matmul_dtype     # bf16 path: halves skip-scratch traffic; f32 path: exact

    # Pad the batch to a 128 multiple so every block is lane-aligned (padded
    # rows are zero and sliced off afterwards; trivial vs. a full-array
    # transpose pass over HBM).
    B_pad = max(128, _round_up(B, 128))
    x_in = x if B_pad == B else jnp.pad(x, ((0, B_pad - B), (0, 0)))

    x_bytes = jnp.dtype(x_in.dtype).itemsize
    o_bytes = jnp.dtype(out_dtype).itemsize
    w_bytes = jnp.dtype(matmul_dtype).itemsize
    s_bytes = jnp.dtype(skip_dtype).itemsize

    # VMEM accounting per batch element (narrow [*, N] blocks lane-pad to 128).
    lane_n = _round_up(N, 128)
    per_elt = (2 * lane_n * (x_bytes + o_bytes)        # double-buffered x/out blocks
               + 2 * F * s_bytes                       # h1/h2 skip scratch
               + (5 * F + lane_n) * 4)                 # live f32 temps (estimate)
    fixed = 2 * (6 * F * F * w_bytes + 6 * F * 128 * 4)  # weights + lane-padded biases

    if batch_tile is None:
        batch_tile = _default_batch_tile(B_pad, per_elt, fixed)
    if B_pad % batch_tile != 0:
        raise ValueError(f"batch_tile={batch_tile} must divide padded batch {B_pad}")
    if batch_tile % 128 != 0 and batch_tile != B_pad:
        raise ValueError("batch_tile must be a multiple of 128")
    grid = (B_pad // batch_tile,)

    vmem_limit = int(min(56 << 20,
                         max(batch_tile * per_elt + fixed + (6 << 20), 24 << 20)))

    kernel = _make_unet5_kernel(N, matmul_dtype)

    # Advisory cost estimate for XLA scheduling around the custom call.
    flops = 2 * B * sum(fi * fo for fi, fo in dims)
    bytes_accessed = (x_in.size * x_bytes + B_pad * N * o_bytes
                      + packed_w.size * w_bytes + packed_b.size * 4)
    cost = pl.CostEstimate(flops=flops, transcendentals=0,
                           bytes_accessed=bytes_accessed)

    grid_spec = pltpu.PrefetchScalarGridSpec(
        num_scalar_prefetch=0,
        grid=grid,
        in_specs=[
            pl.BlockSpec((batch_tile, N), lambda i: (i, 0)),    # x: natural layout
            pl.BlockSpec(packed_w.shape, lambda i: (0, 0, 0)),  # grid-invariant
            pl.BlockSpec(packed_b.shape, lambda i: (0, 0, 0)),  # grid-invariant
        ],
        out_specs=pl.BlockSpec((batch_tile, N), lambda i: (i, 0)),
        scratch_shapes=[
            pltpu.VMEM((F, batch_tile), skip_dtype),            # h1 skip
            pltpu.VMEM((F, batch_tile), skip_dtype),            # h2 skip
        ],
    )

    out = pl.pallas_call(
        kernel,
        out_shape=jax.ShapeDtypeStruct((B_pad, N), out_dtype),
        grid_spec=grid_spec,
        compiler_params=pltpu.CompilerParams(
            dimension_semantics=("parallel",),
            vmem_limit_bytes=vmem_limit),
        cost_estimate=cost,
    )(x_in, packed_w, packed_b)

    return out if B_pad == B else out[:B]


# ---------------------------------------------------------------------------
# Init + plain-JAX reference
# ---------------------------------------------------------------------------
def init_params(key, N, n_units):
    """PyTorch-native layout: w [out, in], b [out]; U(-1/sqrt(in), 1/sqrt(in))."""
    assert n_units[3] == n_units[1] and n_units[4] == n_units[0], \
        "skip connections require n_units[3]==n_units[1], n_units[4]==n_units[0]"
    dims = [(N, n_units[0]), (n_units[0], n_units[1]), (n_units[1], n_units[2]),
            (n_units[2], n_units[3]), (n_units[3], n_units[4]), (n_units[4], N)]
    params = {}
    for idx, (fan_in, fan_out) in enumerate(dims, start=1):
        key, kw, kb = jax.random.split(key, 3)
        bound = 1.0 / jnp.sqrt(float(fan_in))
        params[f"w{idx}"] = jax.random.uniform(
            kw, (fan_out, fan_in), jnp.float32, -bound, bound)
        params[f"b{idx}"] = jax.random.uniform(
            kb, (fan_out,), jnp.float32, -bound, bound)
    return params


def reference_forward(x, params):
    """Plain-JAX reference (ReLU activation, alpha=0 -> dropout is identity)."""
    act = lambda v: jnp.maximum(v, 0.0)
    h1 = act(x @ params["w1"].T + params["b1"])
    h2 = act(h1 @ params["w2"].T + params["b2"])
    h3 = act(h2 @ params["w3"].T + params["b3"])
    h4 = act(h3 @ params["w4"].T + params["b4"])
    h5 = act((h4 + h2) @ params["w5"].T + params["b5"])
    return (h5 + h1) @ params["w6"].T + params["b6"]


# ---------------------------------------------------------------------------
# Self-test
# ---------------------------------------------------------------------------
if __name__ == "__main__":
    # Module config: batch small, N=16, n_units=[32, 24, 48, 24, 32], ReLU, alpha=0.0
    N = 16
    n_units = [32, 24, 48, 24, 32]

    key = jax.random.PRNGKey(0)
    key, kx = jax.random.split(key)
    params = init_params(key, N, n_units)

    # --- small batch (exercises batch padding to a single 128-lane tile) ------
    B = 8
    x = jax.random.normal(kx, (B, N), dtype=jnp.float32)
    ref = reference_forward(x, params)

    pw32, pb32, dims = pack_params(params, matmul_dtype=jnp.float32)
    out_f32 = jax.block_until_ready(denoising_unet5_forward(x, pw32, pb32, dims))
    assert out_f32.shape == (B, N)
    assert jnp.allclose(out_f32, ref, atol=2e-3, rtol=2e-3), "f32 mismatch vs reference"

    pwbf, pbbf, _ = pack_params(params, matmul_dtype=jnp.bfloat16)
    out_bf = jax.block_until_ready(denoising_unet5_forward(x, pwbf, pbbf, dims))
    assert out_bf.shape == (B, N)
    assert jnp.allclose(out_bf, ref, atol=5e-2, rtol=5e-2), "bf16 mismatch vs reference"

    # --- multi-step grid: 2 x 128-lane tiles (v7x: one per TensorCore) --------
    B2 = 256
    key, kx2 = jax.random.split(key)
    x2 = jax.random.normal(kx2, (B2, N), dtype=jnp.float32)
    ref2 = reference_forward(x2, params)
    out2 = jax.block_until_ready(
        denoising_unet5_forward(x2, pw32, pb32, dims, batch_tile=128))
    assert out2.shape == (B2, N)
    assert jnp.allclose(out2, ref2, atol=2e-3, rtol=2e-3), "tiled mismatch vs reference"

    # --- bf16-streamed x (halves input DMA bytes), automatic tile choice ------
    B3 = 512
    key, kx3 = jax.random.split(key)
    x3 = jax.random.normal(kx3, (B3, N), dtype=jnp.float32)
    ref3 = reference_forward(x3, params)
    out3 = jax.block_until_ready(
        denoising_unet5_forward(x3.astype(jnp.bfloat16), pwbf, pbbf, dims,
                                out_dtype=jnp.float32))
    assert out3.shape == (B3, N)
    assert jnp.allclose(out3, ref3, atol=6e-2, rtol=6e-2), "bf16-stream mismatch"

    print("KERNEL_OK")
</pallas_src>

<mosaic_0001>
module attributes {stable_mosaic.version = 11 : i64} {
  func.func @kernel(%arg0: i32, %arg1: memref<128x16xf32, #tpu.memory_space<vmem>>, %arg2: memref<6x48x48xf32, #tpu.memory_space<vmem>>, %arg3: memref<6x48x1xf32, #tpu.memory_space<vmem>>, %arg4: memref<128x16xf32, #tpu.memory_space<vmem>>, %arg5: memref<48x128xf32, #tpu.memory_space<vmem>>, %arg6: memref<48x128xf32, #tpu.memory_space<vmem>>) attributes {dimension_semantics = [#tpu.dimension_semantics<parallel>], iteration_bounds = array<i64: 1>, scalar_prefetch = 0 : i64, scratch_operands = 2 : i64, tpu.core_type = #tpu.core_type<tc>, window_params = [{transform_indices = @transform_0, window_bounds = array<i64: 128, 16>}, {pipeline_mode = #tpu.pipeline_mode<synchronous>, transform_indices = @transform_1, window_bounds = array<i64: 6, 48, 48>}, {pipeline_mode = #tpu.pipeline_mode<synchronous>, transform_indices = @transform_2, window_bounds = array<i64: 6, 48, 1>}, {transform_indices = @transform_3, window_bounds = array<i64: 128, 16>}]} {
    %c0 = arith.constant 0 : index
    %c0_0 = arith.constant 0 : index
    %0 = vector.load %arg1[%c0, %c0_0] : memref<128x16xf32, #tpu.memory_space<vmem>>, vector<128x16xf32>
    %c0_1 = arith.constant 0 : index
    %c0_2 = arith.constant 0 : index
    %c0_3 = arith.constant 0 : index
    %1 = vector.load %arg2[%c0_1, %c0_2, %c0_3] : memref<6x48x48xf32, #tpu.memory_space<vmem>>, vector<1x48x16xf32>
    %2 = vector.shape_cast %1 : vector<1x48x16xf32> to vector<48x16xf32>
    "tpu.trace_start"() <{level = 10 : i32, message = "of,bf->ob"}> : () -> ()
    %cst = arith.constant dense<0.000000e+00> : vector<48x128xf32>
    %3 = tpu.matmul %2, %0, %cst {dimension_numbers = #tpu.dot_dimension_numbers<[1], [1], [0], [0], [0, 0, 1, 0], [], []>} : vector<48x16xf32>, vector<128x16xf32>, vector<48x128xf32> -> vector<48x128xf32>
    "tpu.trace_stop"() : () -> ()
    %c0_4 = arith.constant 0 : index
    %c0_5 = arith.constant 0 : index
    %c0_6 = arith.constant 0 : index
    %4 = vector.load %arg3[%c0_4, %c0_5, %c0_6] : memref<6x48x1xf32, #tpu.memory_space<vmem>>, vector<1x48x1xf32>
    %5 = vector.shape_cast %4 : vector<1x48x1xf32> to vector<48x1xf32>
    %6 = vector.broadcast %5 : vector<48x1xf32> to vector<48x128xf32>
    %7 = arith.addf %3, %6 : vector<48x128xf32>
    %cst_7 = arith.constant 0.000000e+00 : f32
    %8 = vector.broadcast %cst_7 : f32 to vector<48x128xf32>
    %9 = arith.maximumf %7, %8 : vector<48x128xf32>
    %c0_8 = arith.constant 0 : index
    %c0_9 = arith.constant 0 : index
    %10 = vector.load %arg5[%c0_8, %c0_9] : memref<48x128xf32, #tpu.memory_space<vmem>>, vector<48x128xf32>
    tpu.vector_store %arg5[%c0_8, %c0_9], %9 {strides = array<i32>} : memref<48x128xf32, #tpu.memory_space<vmem>>, vector<48x128xf32>,
    %c0_10 = arith.constant 0 : index
    %c0_11 = arith.constant 0 : index
    %11 = vector.load %arg5[%c0_10, %c0_11] : memref<48x128xf32, #tpu.memory_space<vmem>>, vector<48x128xf32>
    %c1 = arith.constant 1 : index
    %c0_12 = arith.constant 0 : index
    %c0_13 = arith.constant 0 : index
    %12 = vector.load %arg2[%c1, %c0_12, %c0_13] : memref<6x48x48xf32, #tpu.memory_space<vmem>>, vector<1x48x48xf32>
    %13 = vector.shape_cast %12 : vector<1x48x48xf32> to vector<48x48xf32>
    %cst_14 = arith.constant dense<0.000000e+00> : vector<48x128xf32>
    %14 = tpu.matmul %13, %11, %cst_14 {dimension_numbers = #tpu.dot_dimension_numbers<[1], [0], [0], [1], [0, 0, 1, 1], [], []>} : vector<48x48xf32>, vector<48x128xf32>, vector<48x128xf32> -> vector<48x128xf32>
    %c1_15 = arith.constant 1 : index
    %c0_16 = arith.constant 0 : index
    %c0_17 = arith.constant 0 : index
    %15 = vector.load %arg3[%c1_15, %c0_16, %c0_17] : memref<6x48x1xf32, #tpu.memory_space<vmem>>, vector<1x48x1xf32>
    %16 = vector.shape_cast %15 : vector<1x48x1xf32> to vector<48x1xf32>
    %17 = vector.broadcast %16 : vector<48x1xf32> to vector<48x128xf32>
    %18 = arith.addf %14, %17 : vector<48x128xf32>
    %cst_18 = arith.constant 0.000000e+00 : f32
    %19 = vector.broadcast %cst_18 : f32 to vector<48x128xf32>
    %20 = arith.maximumf %18, %19 : vector<48x128xf32>
    %c0_19 = arith.constant 0 : index
    %c0_20 = arith.constant 0 : index
    %21 = vector.load %arg6[%c0_19, %c0_20] : memref<48x128xf32, #tpu.memory_space<vmem>>, vector<48x128xf32>
    tpu.vector_store %arg6[%c0_19, %c0_20], %20 {strides = array<i32>} : memref<48x128xf32, #tpu.memory_space<vmem>>, vector<48x128xf32>,
    %c0_21 = arith.constant 0 : index
    %c0_22 = arith.constant 0 : index
    %22 = vector.load %arg6[%c0_21, %c0_22] : memref<48x128xf32, #tpu.memory_space<vmem>>, vector<48x128xf32>
    %c2 = arith.constant 2 : index
    %c0_23 = arith.constant 0 : index
    %c0_24 = arith.constant 0 : index
    %23 = vector.load %arg2[%c2, %c0_23, %c0_24] : memref<6x48x48xf32, #tpu.memory_space<vmem>>, vector<1x48x48xf32>
    %24 = vector.shape_cast %23 : vector<1x48x48xf32> to vector<48x48xf32>
    %cst_25 = arith.constant dense<0.000000e+00> : vector<48x128xf32>
    %25 = tpu.matmul %24, %22, %cst_25 {dimension_numbers = #tpu.dot_dimension_numbers<[1], [0], [0], [1], [0, 0, 1, 1], [], []>} : vector<48x48xf32>, vector<48x128xf32>, vector<48x128xf32> -> vector<48x128xf32>
    %c2_26 = arith.constant 2 : index
    %c0_27 = arith.constant 0 : index
    %c0_28 = arith.constant 0 : index
    %26 = vector.load %arg3[%c2_26, %c0_27, %c0_28] : memref<6x48x1xf32, #tpu.memory_space<vmem>>, vector<1x48x1xf32>
    %27 = vector.shape_cast %26 : vector<1x48x1xf32> to vector<48x1xf32>
    %28 = vector.broadcast %27 : vector<48x1xf32> to vector<48x128xf32>
    %29 = arith.addf %25, %28 : vector<48x128xf32>
    %cst_29 = arith.constant 0.000000e+00 : f32
    %30 = vector.broadcast %cst_29 : f32 to vector<48x128xf32>
    %31 = arith.maximumf %29, %30 : vector<48x128xf32>
    %c3 = arith.constant 3 : index
    %c0_30 = arith.constant 0 : index
    %c0_31 = arith.constant 0 : index
    %32 = vector.load %arg2[%c3, %c0_30, %c0_31] : memref<6x48x48xf32, #tpu.memory_space<vmem>>, vector<1x48x48xf32>
    %33 = vector.shape_cast %32 : vector<1x48x48xf32> to vector<48x48xf32>
    %cst_32 = arith.constant dense<0.000000e+00> : vector<48x128xf32>
    %34 = tpu.matmul %33, %31, %cst_32 {dimension_numbers = #tpu.dot_dimension_numbers<[1], [0], [0], [1], [0, 0, 1, 1], [], []>} : vector<48x48xf32>, vector<48x128xf32>, vector<48x128xf32> -> vector<48x128xf32>
    %c3_33 = arith.constant 3 : index
    %c0_34 = arith.constant 0 : index
    %c0_35 = arith.constant 0 : index
    %35 = vector.load %arg3[%c3_33, %c0_34, %c0_35] : memref<6x48x1xf32, #tpu.memory_space<vmem>>, vector<1x48x1xf32>
    %36 = vector.shape_cast %35 : vector<1x48x1xf32> to vector<48x1xf32>
    %37 = vector.broadcast %36 : vector<48x1xf32> to vector<48x128xf32>
    %38 = arith.addf %34, %37 : vector<48x128xf32>
    %cst_36 = arith.constant 0.000000e+00 : f32
    %39 = vector.broadcast %cst_36 : f32 to vector<48x128xf32>
    %40 = arith.maximumf %38, %39 : vector<48x128xf32>
    %c0_37 = arith.constant 0 : index
    %c0_38 = arith.constant 0 : index
    %41 = vector.load %arg6[%c0_37, %c0_38] : memref<48x128xf32, #tpu.memory_space<vmem>>, vector<48x128xf32>
    %42 = arith.addf %40, %41 : vector<48x128xf32>
    %c4 = arith.constant 4 : index
    %c0_39 = arith.constant 0 : index
    %c0_40 = arith.constant 0 : index
    %43 = vector.load %arg2[%c4, %c0_39, %c0_40] : memref<6x48x48xf32, #tpu.memory_space<vmem>>, vector<1x48x48xf32>
    %44 = vector.shape_cast %43 : vector<1x48x48xf32> to vector<48x48xf32>
    %cst_41 = arith.constant dense<0.000000e+00> : vector<48x128xf32>
    %45 = tpu.matmul %44, %42, %cst_41 {dimension_numbers = #tpu.dot_dimension_numbers<[1], [0], [0], [1], [0, 0, 1, 1], [], []>} : vector<48x48xf32>, vector<48x128xf32>, vector<48x128xf32> -> vector<48x128xf32>
    %c4_42 = arith.constant 4 : index
    %c0_43 = arith.constant 0 : index
    %c0_44 = arith.constant 0 : index
    %46 = vector.load %arg3[%c4_42, %c0_43, %c0_44] : memref<6x48x1xf32, #tpu.memory_space<vmem>>, vector<1x48x1xf32>
    %47 = vector.shape_cast %46 : vector<1x48x1xf32> to vector<48x1xf32>
    %48 = vector.broadcast %47 : vector<48x1xf32> to vector<48x128xf32>
    %49 = arith.addf %45, %48 : vector<48x128xf32>
    %cst_45 = arith.constant 0.000000e+00 : f32
    %50 = vector.broadcast %cst_45 : f32 to vector<48x128xf32>
    %51 = arith.maximumf %49, %50 : vector<48x128xf32>
    %c0_46 = arith.constant 0 : index
    %c0_47 = arith.constant 0 : index
    %52 = vector.load %arg5[%c0_46, %c0_47] : memref<48x128xf32, #tpu.memory_space<vmem>>, vector<48x128xf32>
    %53 = arith.addf %51, %52 : vector<48x128xf32>
    %c5 = arith.constant 5 : index
    %c0_48 = arith.constant 0 : index
    %c0_49 = arith.constant 0 : index
    %54 = vector.load %arg2[%c5, %c0_48, %c0_49] : memref<6x48x48xf32, #tpu.memory_space<vmem>>, vector<1x48x48xf32>
    %55 = vector.shape_cast %54 : vector<1x48x48xf32> to vector<48x48xf32>
    %cst_50 = arith.constant dense<0.000000e+00> : vector<48x128xf32>
    %56 = tpu.matmul %55, %53, %cst_50 {dimension_numbers = #tpu.dot_dimension_numbers<[1], [0], [0], [1], [0, 0, 1, 1], [], []>} : vector<48x48xf32>, vector<48x128xf32>, vector<48x128xf32> -> vector<48x128xf32>
    %c5_51 = arith.constant 5 : index
    %c0_52 = arith.constant 0 : index
    %c0_53 = arith.constant 0 : index
    %57 = vector.load %arg3[%c5_51, %c0_52, %c0_53] : memref<6x48x1xf32, #tpu.memory_space<vmem>>, vector<1x48x1xf32>
    %58 = vector.shape_cast %57 : vector<1x48x1xf32> to vector<48x1xf32>
    %59 = vector.broadcast %58 : vector<48x1xf32> to vector<48x128xf32>
    %60 = arith.addf %56, %59 : vector<48x128xf32>
    %61 = vector.extract_strided_slice %60 {offsets = [0, 0], sizes = [16, 128], strides = [1, 1]} : vector<48x128xf32> to vector<16x128xf32>
    %62 = tpu.transpose %61, [1, 0] : vector<16x128xf32> -> vector<128x16xf32>
    %c0_54 = arith.constant 0 : index
    %c0_55 = arith.constant 0 : index
    %63 = vector.load %arg4[%c0_54, %c0_55] : memref<128x16xf32, #tpu.memory_space<vmem>>, vector<128x16xf32>
    tpu.vector_store %arg4[%c0_54, %c0_55], %62 {strides = array<i32>} : memref<128x16xf32, #tpu.memory_space<vmem>>, vector<128x16xf32>,
    return
  }
  func.func @transform_0(%arg0: i32) -> (i32, i32) {
    %c0_i32 = arith.constant 0 : i32
    %c0_i32_0 = arith.constant 0 : i32
    return %arg0, %c0_i32 : i32, i32
  }
  func.func @transform_1(%arg0: i32) -> (i32, i32, i32) {
    %c0_i32 = arith.constant 0 : i32
    %c0_i32_0 = arith.constant 0 : i32
    %c0_i32_1 = arith.constant 0 : i32
    %c0_i32_2 = arith.constant 0 : i32
    return %c0_i32, %c0_i32_0, %c0_i32_1 : i32, i32, i32
  }
  func.func @transform_2(%arg0: i32) -> (i32, i32, i32) {
    %c0_i32 = arith.constant 0 : i32
    %c0_i32_0 = arith.constant 0 : i32
    %c0_i32_1 = arith.constant 0 : i32
    %c0_i32_2 = arith.constant 0 : i32
    return %c0_i32, %c0_i32_0, %c0_i32_1 : i32, i32, i32
  }
  func.func @transform_3(%arg0: i32) -> (i32, i32) {
    %c0_i32 = arith.constant 0 : i32
    %c0_i32_0 = arith.constant 0 : i32
    return %arg0, %c0_i32 : i32, i32
  }
}

</mosaic_0001>

<llo_original>
// kernel: tpu_custom_call.1
$region0: #{tpu_custom_call.1}
  #allocation0 [shape = 'u32[]', space=smem, size = 0x4, offset = 0x4, fixed_abs, tag = 'smem constant byte address 0x4 - core index']
  #allocation1 [shape = 'u32[72,128]{1,0:T(1,128)}', space=vmem, size = 0x9000, scoped, tag = 'internal scratch']
  #allocation2 [shape = 'f32[48,128]{1,0:T(8,128)}', space=vmem, size = 0x6000, scoped, tag = 'scratch operand']
  #allocation3 [shape = 'f32[48,128]{1,0:T(8,128)}', space=vmem, size = 0x6000, scoped, tag = 'scratch operand']
  %s0 = inlined_call_operand.vmem [shape: f32[128,16], index: 0, kind: input, shape index: {}]
  %s1 = inlined_call_operand.vmem [shape: f32[6,48,48], index: 1, kind: input, shape index: {}]
  %s2 = inlined_call_operand.vmem [shape: f32[6,48,1], index: 2, kind: input, shape index: {}]
  %s3 = inlined_call_operand.vmem [shape: f32[128,16], index: 3, kind: output, shape index: {}]
  %s4 = sld [smem:[#allocation0]]
  $region22: #{tpu_custom_call.1} parent=0
    _
  %s6 = ssub.s32 1, %s4
  %s7 = scalar_select 0, %s6, %s4
  // Predicated region
  $region2: #{tpu_custom_call.1} parent=0 // pred_check
    _
  $region3: #{tpu_custom_call.1} parent=0 // pred_check_branch
    %9 = sbr.rel (0) target = $region5
  $region4: #{tpu_custom_call.1} parent=0 // pred_region
    _
  $region5: #{tpu_custom_call.1} parent=0 // pred_fallthru
    _
  // Predicated region
  $region6: #{tpu_custom_call.1} parent=0 // pred_check
    _
  $region7: #{tpu_custom_call.1} parent=0 // pred_check_branch
    %11 = sbr.rel (0) target = $region9
  $region8: #{tpu_custom_call.1} parent=0 // pred_region
    _
  $region9: #{tpu_custom_call.1} parent=0 // pred_fallthru
    _
  // Predicated region
  $region10: #{tpu_custom_call.1} parent=0 // pred_check
    _
  $region11: #{tpu_custom_call.1} parent=0 // pred_check_branch
    %13 = sbr.rel (0) target = $region13
  $region12: #{tpu_custom_call.1} parent=0 // pred_region
    _
  $region13: #{tpu_custom_call.1} parent=0 // pred_fallthru
    _
  %v14 = vld [vmem:[%s0] sm:$0xff]
  %v15 = vld [vmem:[%s0 + $0x8] sm:$0xff]
  %v16 = vld [vmem:[%s0 + $0x10] sm:$0xff]
  %v17 = vld [vmem:[%s0 + $0x18] sm:$0xff]
  %v18 = vld [vmem:[%s0 + $0x20] sm:$0xff]
  %v19 = vld [vmem:[%s0 + $0x28] sm:$0xff]
  %v20 = vld [vmem:[%s0 + $0x30] sm:$0xff]
  %v21 = vld [vmem:[%s0 + $0x38] sm:$0xff]
  %v22 = vld [vmem:[%s0 + $0x40] sm:$0xff]
  %v23 = vld [vmem:[%s0 + $0x48] sm:$0xff]
  %v24 = vld [vmem:[%s0 + $0x50] sm:$0xff]
  %v25 = vld [vmem:[%s0 + $0x58] sm:$0xff]
  %v26 = vld [vmem:[%s0 + $0x60] sm:$0xff]
  %v27 = vld [vmem:[%s0 + $0x68] sm:$0xff]
  %v28 = vld [vmem:[%s0 + $0x70] sm:$0xff]
  %v29 = vld [vmem:[%s0 + $0x78] sm:$0xff]
  %v30 = vld [vmem:[%s1] sm:$0xff]
  %v31 = vld [vmem:[%s1 + $0x8] sm:$0xff]
  %v32 = vld [vmem:[%s1 + $0x10] sm:$0xff]
  %v33 = vld [vmem:[%s1 + $0x18] sm:$0xff]
  %v34 = vld [vmem:[%s1 + $0x20] sm:$0xff]
  %v35 = vld [vmem:[%s1 + $0x28] sm:$0xff]
  %v36 = vld [vmem:[%s2] sm:$0xff]
  %v37 = vld [vmem:[%s2 + $0x8] sm:$0xff]
  %v38 = vld [vmem:[%s2 + $0x10] sm:$0xff]
  %v39 = vld [vmem:[%s2 + $0x18] sm:$0xff]
  %v40 = vld [vmem:[%s2 + $0x20] sm:$0xff]
  %v41 = vld [vmem:[%s2 + $0x28] sm:$0xff]
  %43 = vset.pattern.permute.xlu0 0
  %44 = vperm.xlu0 %43, %v36
  %v45 = vpop.permute.xlu0 %44
  %48 = vset.pattern.permute.xlu0 0
  %49 = vperm.xlu0 %48, %v37
  %v50 = vpop.permute.xlu0 %49
  %53 = vset.pattern.permute.xlu0 0
  %54 = vperm.xlu0 %53, %v38
  %v55 = vpop.permute.xlu0 %54
  %58 = vset.pattern.permute.xlu0 0
  %59 = vperm.xlu0 %58, %v39
  %v60 = vpop.permute.xlu0 %59
  %63 = vset.pattern.permute.xlu0 0
  %64 = vperm.xlu0 %63, %v40
  %v65 = vpop.permute.xlu0 %64
  %68 = vset.pattern.permute.xlu0 0
  %69 = vperm.xlu0 %68, %v41
  %v70 = vpop.permute.xlu0 %69
  %vm72 = vcmask 130048
  %v74 = vsel %vm72, %v30, 0
  %v77 = vsel %vm72, %v31, 0
  %v80 = vsel %vm72, %v32, 0
  %v83 = vsel %vm72, %v33, 0
  %v86 = vsel %vm72, %v34, 0
  %v89 = vsel %vm72, %v35, 0
  %v92 = vsel %vm72, %v14, 0
  %v95 = vsel %vm72, %v15, 0
  %v98 = vsel %vm72, %v16, 0
  %v101 = vsel %vm72, %v17, 0
  %v104 = vsel %vm72, %v18, 0
  %v107 = vsel %vm72, %v19, 0
  %v110 = vsel %vm72, %v20, 0
  %v113 = vsel %vm72, %v21, 0
  %v116 = vsel %vm72, %v22, 0
  %v119 = vsel %vm72, %v23, 0
  %v122 = vsel %vm72, %v24, 0
  %v125 = vsel %vm72, %v25, 0
  %v128 = vsel %vm72, %v26, 0
  %v131 = vsel %vm72, %v27, 0
  %v134 = vsel %vm72, %v28, 0
  %v137 = vsel %vm72, %v29, 0
  %139 = vmatpush.xpose.msra.mxu0 %v137
  %140 = vmatpush.xpose.msra.mxu0 %v134
  %141 = vmatpush.xpose.msra.mxu0 %v131
  %142 = vmatpush.xpose.msra.mxu0 %v128
  %143 = vmatpush.xpose.msra.mxu0 %v125
  %144 = vmatpush.xpose.msra.mxu0 %v122
  %145 = vmatpush.xpose.msra.mxu0 %v119
  %146 = vmatpush.xpose.msra.mxu0 %v116
  %147 = vmatpush.xpose.msra.mxu0 %v113
  %148 = vmatpush.xpose.msra.mxu0 %v110
  %149 = vmatpush.xpose.msra.mxu0 %v107
  %150 = vmatpush.xpose.msra.mxu0 %v104
  %151 = vmatpush.xpose.msra.mxu0 %v101
  %152 = vmatpush.xpose.msra.mxu0 %v98
  %153 = vmatpush.xpose.msra.mxu0 %v95
  %154 = vmatpush.xpose.msra.mxu0 %v92
  %155 = vmatmul.f32.gmra.mxu0 %v74
  %v156 = vpop.f32.mrf.mxu0
  %v157 = vadd.f32 %v45, %v156
  %158 = vmatmul.f32.gmra.mxu0 %v77
  %v159 = vpop.f32.mrf.mxu0
  %v160 = vadd.f32 %v50, %v159
  %161 = vmatmul.f32.gmra.mxu0 %v80
  %v162 = vpop.f32.mrf.mxu0
  %v163 = vadd.f32 %v55, %v162
  %164 = vmatmul.f32.gmra.mxu0 %v83
  %v165 = vpop.f32.mrf.mxu0
  %v166 = vadd.f32 %v60, %v165
  %167 = vmatmul.f32.gmra.mxu0 %v86
  %v168 = vpop.f32.mrf.mxu0
  %v169 = vadd.f32 %v65, %v168
  %170 = vmatmul.f32.gmra.mxu0 %v89
  %v171 = vpop.f32.mrf.mxu0
  %v172 = vadd.f32 %v70, %v171
  %173 = vdwg.mxu0
  %v174 = vmax.f32 %v157, 0.0
  %v175 = vmax.f32 %v160, 0.0
  %v176 = vmax.f32 %v163, 0.0
  %v177 = vmax.f32 %v166, 0.0
  %v178 = vmax.f32 %v169, 0.0
  %v179 = vmax.f32 %v172, 0.0
  %180 = vst [vmem:[#allocation2] sm:$0xff] %v174
  %181 = vst [vmem:[#allocation2 + $0x8] sm:$0xff] %v175
  %182 = vst [vmem:[#allocation2 + $0x10] sm:$0xff] %v176
  %183 = vst [vmem:[#allocation2 + $0x18] sm:$0xff] %v177
  %184 = vst [vmem:[#allocation2 + $0x20] sm:$0xff] %v178
  %185 = vst [vmem:[#allocation2 + $0x28] sm:$0xff] %v179
  %v186 = vld [vmem:[#allocation2] sm:$0xff]
  %v187 = vld [vmem:[#allocation2 + $0x8] sm:$0xff]
  %v188 = vld [vmem:[#allocation2 + $0x10] sm:$0xff]
  %v189 = vld [vmem:[#allocation2 + $0x18] sm:$0xff]
  %v190 = vld [vmem:[#allocation2 + $0x20] sm:$0xff]
  %v191 = vld [vmem:[#allocation2 + $0x28] sm:$0xff]
  %s192 = scalar_lea.vmem %s1, 48
  %v193 = vld [vmem:[%s192] sm:$0xff]
  %v194 = vld [vmem:[%s192 + $0x8] sm:$0xff]
  %v195 = vld [vmem:[%s192 + $0x10] sm:$0xff]
  %v196 = vld [vmem:[%s192 + $0x18] sm:$0xff]
  %v197 = vld [vmem:[%s192 + $0x20] sm:$0xff]
  %v198 = vld [vmem:[%s192 + $0x28] sm:$0xff]
  %s199 = scalar_lea.vmem %s2, 48
  %v200 = vld [vmem:[%s199] sm:$0xff]
  %v201 = vld [vmem:[%s199 + $0x8] sm:$0xff]
  %v202 = vld [vmem:[%s199 + $0x10] sm:$0xff]
  %v203 = vld [vmem:[%s199 + $0x18] sm:$0xff]
  %v204 = vld [vmem:[%s199 + $0x20] sm:$0xff]
  %v205 = vld [vmem:[%s199 + $0x28] sm:$0xff]
  %207 = vset.pattern.permute.xlu0 0
  %208 = vperm.xlu0 %207, %v200
  %v209 = vpop.permute.xlu0 %208
  %212 = vset.pattern.permute.xlu0 0
  %213 = vperm.xlu0 %212, %v201
  %v214 = vpop.permute.xlu0 %213
  %217 = vset.pattern.permute.xlu0 0
  %218 = vperm.xlu0 %217, %v202
  %v219 = vpop.permute.xlu0 %218
  %222 = vset.pattern.permute.xlu0 0
  %223 = vperm.xlu0 %222, %v203
  %v224 = vpop.permute.xlu0 %223
  %227 = vset.pattern.permute.xlu0 0
  %228 = vperm.xlu0 %227, %v204
  %v229 = vpop.permute.xlu0 %228
  %232 = vset.pattern.permute.xlu0 0
  %233 = vperm.xlu0 %232, %v205
  %v234 = vpop.permute.xlu0 %233
  %vm236 = vcmask 392192
  %v238 = vsel %vm236, %v193, 0
  %v241 = vsel %vm236, %v194, 0
  %v244 = vsel %vm236, %v195, 0
  %v247 = vsel %vm236, %v196, 0
  %v250 = vsel %vm236, %v197, 0
  %v253 = vsel %vm236, %v198, 0
  %255 = vmatpush.msra.mxu0 0.0
  %256 = vmatpush.msra.mxu0 0.0
  %257 = vmatpush.msra.mxu0 0.0
  %258 = vmatpush.msra.mxu0 0.0
  %259 = vmatpush.msra.mxu0 0.0
  %260 = vmatpush.msra.mxu0 0.0
  %261 = vmatpush.msra.mxu0 0.0
  %262 = vmatpush.msra.mxu0 0.0
  %263 = vmatpush.msra.mxu0 0.0
  %264 = vmatpush.msra.mxu0 0.0
  %265 = vmatpush.msra.mxu0 %v191
  %266 = vmatpush.msra.mxu0 %v190
  %267 = vmatpush.msra.mxu0 %v189
  %268 = vmatpush.msra.mxu0 %v188
  %269 = vmatpush.msra.mxu0 %v187
  %270 = vmatpush.msra.mxu0 %v186
  %271 = vmatmul.f32.gmra.mxu0 %v238
  %v272 = vpop.f32.mrf.mxu0
  %v273 = vadd.f32 %v209, %v272
  %274 = vmatmul.f32.gmra.mxu0 %v241
  %v275 = vpop.f32.mrf.mxu0
  %v276 = vadd.f32 %v214, %v275
  %277 = vmatmul.f32.gmra.mxu0 %v244
  %v278 = vpop.f32.mrf.mxu0
  %v279 = vadd.f32 %v219, %v278
  %280 = vmatmul.f32.gmra.mxu0 %v247
  %v281 = vpop.f32.mrf.mxu0
  %v282 = vadd.f32 %v224, %v281
  %283 = vmatmul.f32.gmra.mxu0 %v250
  %v284 = vpop.f32.mrf.mxu0
  %v285 = vadd.f32 %v229, %v284
  %286 = vmatmul.f32.gmra.mxu0 %v253
  %v287 = vpop.f32.mrf.mxu0
  %v288 = vadd.f32 %v234, %v287
  %289 = vdwg.mxu0
  %v290 = vmax.f32 %v273, 0.0
  %v291 = vmax.f32 %v276, 0.0
  %v292 = vmax.f32 %v279, 0.0
  %v293 = vmax.f32 %v282, 0.0
  %v294 = vmax.f32 %v285, 0.0
  %v295 = vmax.f32 %v288, 0.0
  %296 = vst [vmem:[#allocation3] sm:$0xff] %v290
  %297 = vst [vmem:[#allocation3 + $0x8] sm:$0xff] %v291
  %298 = vst [vmem:[#allocation3 + $0x10] sm:$0xff] %v292
  %299 = vst [vmem:[#allocation3 + $0x18] sm:$0xff] %v293
  %300 = vst [vmem:[#allocation3 + $0x20] sm:$0xff] %v294
  %301 = vst [vmem:[#allocation3 + $0x28] sm:$0xff] %v295
  %v302 = vld [vmem:[#allocation3] sm:$0xff]
  %v303 = vld [vmem:[#allocation3 + $0x8] sm:$0xff]
  %v304 = vld [vmem:[#allocation3 + $0x10] sm:$0xff]
  %v305 = vld [vmem:[#allocation3 + $0x18] sm:$0xff]
  %v306 = vld [vmem:[#allocation3 + $0x20] sm:$0xff]
  %v307 = vld [vmem:[#allocation3 + $0x28] sm:$0xff]
  %s308 = scalar_lea.vmem %s1, 96
  %v309 = vld [vmem:[%s308] sm:$0xff]
  %v310 = vld [vmem:[%s308 + $0x8] sm:$0xff]
  %v311 = vld [vmem:[%s308 + $0x10] sm:$0xff]
  %v312 = vld [vmem:[%s308 + $0x18] sm:$0xff]
  %v313 = vld [vmem:[%s308 + $0x20] sm:$0xff]
  %v314 = vld [vmem:[%s308 + $0x28] sm:$0xff]
  %s315 = scalar_lea.vmem %s2, 96
  %v316 = vld [vmem:[%s315] sm:$0xff]
  %v317 = vld [vmem:[%s315 + $0x8] sm:$0xff]
  %v318 = vld [vmem:[%s315 + $0x10] sm:$0xff]
  %v319 = vld [vmem:[%s315 + $0x18] sm:$0xff]
  %v320 = vld [vmem:[%s315 + $0x20] sm:$0xff]
  %v321 = vld [vmem:[%s315 + $0x28] sm:$0xff]
  %323 = vset.pattern.permute.xlu0 0
  %324 = vperm.xlu0 %323, %v316
  %v325 = vpop.permute.xlu0 %324
  %328 = vset.pattern.permute.xlu0 0
  %329 = vperm.xlu0 %328, %v317
  %v330 = vpop.permute.xlu0 %329
  %333 = vset.pattern.permute.xlu0 0
  %334 = vperm.xlu0 %333, %v318
  %v335 = vpop.permute.xlu0 %334
  %338 = vset.pattern.permute.xlu0 0
  %339 = vperm.xlu0 %338, %v319
  %v340 = vpop.permute.xlu0 %339
  %343 = vset.pattern.permute.xlu0 0
  %344 = vperm.xlu0 %343, %v320
  %v345 = vpop.permute.xlu0 %344
  %348 = vset.pattern.permute.xlu0 0
  %349 = vperm.xlu0 %348, %v321
  %v350 = vpop.permute.xlu0 %349
  %v353 = vsel %vm236, %v309, 0
  %v356 = vsel %vm236, %v310, 0
  %v359 = vsel %vm236, %v311, 0
  %v362 = vsel %vm236, %v312, 0
  %v365 = vsel %vm236, %v313, 0
  %v368 = vsel %vm236, %v314, 0
  %370 = vmatpush.msra.mxu0 0.0
  %371 = vmatpush.msra.mxu0 0.0
  %372 = vmatpush.msra.mxu0 0.0
  %373 = vmatpush.msra.mxu0 0.0
  %374 = vmatpush.msra.mxu0 0.0
  %375 = vmatpush.msra.mxu0 0.0
  %376 = vmatpush.msra.mxu0 0.0
  %377 = vmatpush.msra.mxu0 0.0
  %378 = vmatpush.msra.mxu0 0.0
  %379 = vmatpush.msra.mxu0 0.0
  %380 = vmatpush.msra.mxu0 %v307
  %381 = vmatpush.msra.mxu0 %v306
  %382 = vmatpush.msra.mxu0 %v305
  %383 = vmatpush.msra.mxu0 %v304
  %384 = vmatpush.msra.mxu0 %v303
  %385 = vmatpush.msra.mxu0 %v302
  %386 = vmatmul.f32.gmra.mxu0 %v353
  %v387 = vpop.f32.mrf.mxu0
  %v388 = vadd.f32 %v325, %v387
  %389 = vmatmul.f32.gmra.mxu0 %v356
  %v390 = vpop.f32.mrf.mxu0
  %v391 = vadd.f32 %v330, %v390
  %392 = vmatmul.f32.gmra.mxu0 %v359
  %v393 = vpop.f32.mrf.mxu0
  %v394 = vadd.f32 %v335, %v393
  %395 = vmatmul.f32.gmra.mxu0 %v362
  %v396 = vpop.f32.mrf.mxu0
  %v397 = vadd.f32 %v340, %v396
  %398 = vmatmul.f32.gmra.mxu0 %v365
  %v399 = vpop.f32.mrf.mxu0
  %v400 = vadd.f32 %v345, %v399
  %401 = vmatmul.f32.gmra.mxu0 %v368
  %v402 = vpop.f32.mrf.mxu0
  %v403 = vadd.f32 %v350, %v402
  %404 = vdwg.mxu0
  %v405 = vmax.f32 %v388, 0.0
  %v406 = vmax.f32 %v391, 0.0
  %v407 = vmax.f32 %v394, 0.0
  %v408 = vmax.f32 %v397, 0.0
  %v409 = vmax.f32 %v400, 0.0
  %v410 = vmax.f32 %v403, 0.0
  %s411 = scalar_lea.vmem %s1, 144
  %v412 = vld [vmem:[%s411] sm:$0xff]
  %v413 = vld [vmem:[%s411 + $0x8] sm:$0xff]
  %v414 = vld [vmem:[%s411 + $0x10] sm:$0xff]
  %v415 = vld [vmem:[%s411 + $0x18] sm:$0xff]
  %v416 = vld [vmem:[%s411 + $0x20] sm:$0xff]
  %v417 = vld [vmem:[%s411 + $0x28] sm:$0xff]
  %s418 = scalar_lea.vmem %s2, 144
  %v419 = vld [vmem:[%s418] sm:$0xff]
  %v420 = vld [vmem:[%s418 + $0x8] sm:$0xff]
  %v421 = vld [vmem:[%s418 + $0x10] sm:$0xff]
  %v422 = vld [vmem:[%s418 + $0x18] sm:$0xff]
  %v423 = vld [vmem:[%s418 + $0x20] sm:$0xff]
  %v424 = vld [vmem:[%s418 + $0x28] sm:$0xff]
  %426 = vset.pattern.permute.xlu0 0
  %427 = vperm.xlu0 %426, %v419
  %v428 = vpop.permute.xlu0 %427
  %431 = vset.pattern.permute.xlu0 0
  %432 = vperm.xlu0 %431, %v420
  %v433 = vpop.permute.xlu0 %432
  %436 = vset.pattern.permute.xlu0 0
  %437 = vperm.xlu0 %436, %v421
  %v438 = vpop.permute.xlu0 %437
  %441 = vset.pattern.permute.xlu0 0
  %442 = vperm.xlu0 %441, %v422
  %v443 = vpop.permute.xlu0 %442
  %446 = vset.pattern.permute.xlu0 0
  %447 = vperm.xlu0 %446, %v423
  %v448 = vpop.permute.xlu0 %447
  %451 = vset.pattern.permute.xlu0 0
  %452 = vperm.xlu0 %451, %v424
  %v453 = vpop.permute.xlu0 %452
  %v456 = vsel %vm236, %v412, 0
  %v459 = vsel %vm236, %v413, 0
  %v462 = vsel %vm236, %v414, 0
  %v465 = vsel %vm236, %v415, 0
  %v468 = vsel %vm236, %v416, 0
  %v471 = vsel %vm236, %v417, 0
  %473 = vmatpush.msra.mxu0 0.0
  %474 = vmatpush.msra.mxu0 0.0
  %475 = vmatpush.msra.mxu0 0.0
  %476 = vmatpush.msra.mxu0 0.0
  %477 = vmatpush.msra.mxu0 0.0
  %478 = vmatpush.msra.mxu0 0.0
  %479 = vmatpush.msra.mxu0 0.0
  %480 = vmatpush.msra.mxu0 0.0
  %481 = vmatpush.msra.mxu0 0.0
  %482 = vmatpush.msra.mxu0 0.0
  %483 = vmatpush.msra.mxu0 %v410
  %484 = vmatpush.msra.mxu0 %v409
  %485 = vmatpush.msra.mxu0 %v408
  %486 = vmatpush.msra.mxu0 %v407
  %487 = vmatpush.msra.mxu0 %v406
  %488 = vmatpush.msra.mxu0 %v405
  %489 = vmatmul.f32.gmra.mxu0 %v456
  %v490 = vpop.f32.mrf.mxu0
  %v491 = vadd.f32 %v428, %v490
  %492 = vmatmul.f32.gmra.mxu0 %v459
  %v493 = vpop.f32.mrf.mxu0
  %v494 = vadd.f32 %v433, %v493
  %495 = vmatmul.f32.gmra.mxu0 %v462
  %v496 = vpop.f32.mrf.mxu0
  %v497 = vadd.f32 %v438, %v496
  %498 = vmatmul.f32.gmra.mxu0 %v465
  %v499 = vpop.f32.mrf.mxu0
  %v500 = vadd.f32 %v443, %v499
  %501 = vmatmul.f32.gmra.mxu0 %v468
  %v502 = vpop.f32.mrf.mxu0
  %v503 = vadd.f32 %v448, %v502
  %504 = vmatmul.f32.gmra.mxu0 %v471
  %v505 = vpop.f32.mrf.mxu0
  %v506 = vadd.f32 %v453, %v505
  %507 = vdwg.mxu0
  %v508 = vmax.f32 %v491, 0.0
  %v509 = vmax.f32 %v494, 0.0
  %v510 = vmax.f32 %v497, 0.0
  %v511 = vmax.f32 %v500, 0.0
  %v512 = vmax.f32 %v503, 0.0
  %v513 = vmax.f32 %v506, 0.0
  %v514 = vadd.f32 %v508, %v302
  %v515 = vadd.f32 %v509, %v303
  %v516 = vadd.f32 %v510, %v304
  %v517 = vadd.f32 %v511, %v305
  %v518 = vadd.f32 %v512, %v306
  %v519 = vadd.f32 %v513, %v307
  %s520 = scalar_lea.vmem %s1, 192
  %v521 = vld [vmem:[%s520] sm:$0xff]
  %v522 = vld [vmem:[%s520 + $0x8] sm:$0xff]
  %v523 = vld [vmem:[%s520 + $0x10] sm:$0xff]
  %v524 = vld [vmem:[%s520 + $0x18] sm:$0xff]
  %v525 = vld [vmem:[%s520 + $0x20] sm:$0xff]
  %v526 = vld [vmem:[%s520 + $0x28] sm:$0xff]
  %s527 = scalar_lea.vmem %s2, 192
  %v528 = vld [vmem:[%s527] sm:$0xff]
  %v529 = vld [vmem:[%s527 + $0x8] sm:$0xff]
  %v530 = vld [vmem:[%s527 + $0x10] sm:$0xff]
  %v531 = vld [vmem:[%s527 + $0x18] sm:$0xff]
  %v532 = vld [vmem:[%s527 + $0x20] sm:$0xff]
  %v533 = vld [vmem:[%s527 + $0x28] sm:$0xff]
  %535 = vset.pattern.permute.xlu0 0
  %536 = vperm.xlu0 %535, %v528
  %v537 = vpop.permute.xlu0 %536
  %540 = vset.pattern.permute.xlu0 0
  %541 = vperm.xlu0 %540, %v529
  %v542 = vpop.permute.xlu0 %541
  %545 = vset.pattern.permute.xlu0 0
  %546 = vperm.xlu0 %545, %v530
  %v547 = vpop.permute.xlu0 %546
  %550 = vset.pattern.permute.xlu0 0
  %551 = vperm.xlu0 %550, %v531
  %v552 = vpop.permute.xlu0 %551
  %555 = vset.pattern.permute.xlu0 0
  %556 = vperm.xlu0 %555, %v532
  %v557 = vpop.permute.xlu0 %556
  %560 = vset.pattern.permute.xlu0 0
  %561 = vperm.xlu0 %560, %v533
  %v562 = vpop.permute.xlu0 %561
  %v565 = vsel %vm236, %v521, 0
  %v568 = vsel %vm236, %v522, 0
  %v571 = vsel %vm236, %v523, 0
  %v574 = vsel %vm236, %v524, 0
  %v577 = vsel %vm236, %v525, 0
  %v580 = vsel %vm236, %v526, 0
  %582 = vmatpush.msra.mxu0 0.0
  %583 = vmatpush.msra.mxu0 0.0
  %584 = vmatpush.msra.mxu0 0.0
  %585 = vmatpush.msra.mxu0 0.0
  %586 = vmatpush.msra.mxu0 0.0
  %587 = vmatpush.msra.mxu0 0.0
  %588 = vmatpush.msra.mxu0 0.0
  %589 = vmatpush.msra.mxu0 0.0
  %590 = vmatpush.msra.mxu0 0.0
  %591 = vmatpush.msra.mxu0 0.0
  %592 = vmatpush.msra.mxu0 %v519
  %593 = vmatpush.msra.mxu0 %v518
  %594 = vmatpush.msra.mxu0 %v517
  %595 = vmatpush.msra.mxu0 %v516
  %596 = vmatpush.msra.mxu0 %v515
  %597 = vmatpush.msra.mxu0 %v514
  %598 = vmatmul.f32.gmra.mxu0 %v565
  %v599 = vpop.f32.mrf.mxu0
  %v600 = vadd.f32 %v537, %v599
  %601 = vmatmul.f32.gmra.mxu0 %v568
  %v602 = vpop.f32.mrf.mxu0
  %v603 = vadd.f32 %v542, %v602
  %604 = vmatmul.f32.gmra.mxu0 %v571
  %v605 = vpop.f32.mrf.mxu0
  %v606 = vadd.f32 %v547, %v605
  %607 = vmatmul.f32.gmra.mxu0 %v574
  %v608 = vpop.f32.mrf.mxu0
  %v609 = vadd.f32 %v552, %v608
  %610 = vmatmul.f32.gmra.mxu0 %v577
  %v611 = vpop.f32.mrf.mxu0
  %v612 = vadd.f32 %v557, %v611
  %613 = vmatmul.f32.gmra.mxu0 %v580
  %v614 = vpop.f32.mrf.mxu0
  %v615 = vadd.f32 %v562, %v614
  %616 = vdwg.mxu0
  %v617 = vmax.f32 %v600, 0.0
  %v618 = vmax.f32 %v603, 0.0
  %v619 = vmax.f32 %v606, 0.0
  %v620 = vmax.f32 %v609, 0.0
  %v621 = vmax.f32 %v612, 0.0
  %v622 = vmax.f32 %v615, 0.0
  %v623 = vld [vmem:[#allocation2] sm:$0xff]
  %v624 = vld [vmem:[#allocation2 + $0x8] sm:$0xff]
  %v625 = vld [vmem:[#allocation2 + $0x10] sm:$0xff]
  %v626 = vld [vmem:[#allocation2 + $0x18] sm:$0xff]
  %v627 = vld [vmem:[#allocation2 + $0x20] sm:$0xff]
  %v628 = vld [vmem:[#allocation2 + $0x28] sm:$0xff]
  %v629 = vadd.f32 %v617, %v623
  %v630 = vadd.f32 %v618, %v624
  %v631 = vadd.f32 %v619, %v625
  %v632 = vadd.f32 %v620, %v626
  %v633 = vadd.f32 %v621, %v627
  %v634 = vadd.f32 %v622, %v628
  %s635 = scalar_lea.vmem %s1, 240
  %v636 = vld [vmem:[%s635] sm:$0xff]
  %v637 = vld [vmem:[%s635 + $0x8] sm:$0xff]
  %v638 = vld [vmem:[%s635 + $0x10] sm:$0xff]
  %v639 = vld [vmem:[%s635 + $0x18] sm:$0xff]
  %v640 = vld [vmem:[%s635 + $0x20] sm:$0xff]
  %v641 = vld [vmem:[%s635 + $0x28] sm:$0xff]
  %s642 = scalar_lea.vmem %s2, 240
  %v643 = vld [vmem:[%s642] sm:$0xff]
  %v644 = vld [vmem:[%s642 + $0x8] sm:$0xff]
  %v645 = vld [vmem:[%s642 + $0x10] sm:$0xff]
  %v646 = vld [vmem:[%s642 + $0x18] sm:$0xff]
  %v647 = vld [vmem:[%s642 + $0x20] sm:$0xff]
  %v648 = vld [vmem:[%s642 + $0x28] sm:$0xff]
  %650 = vset.pattern.permute.xlu0 0
  %651 = vperm.xlu0 %650, %v643
  %v652 = vpop.permute.xlu0 %651
  %655 = vset.pattern.permute.xlu0 0
  %656 = vperm.xlu0 %655, %v644
  %v657 = vpop.permute.xlu0 %656
  %660 = vset.pattern.permute.xlu0 0
  %661 = vperm.xlu0 %660, %v645
  %v662 = vpop.permute.xlu0 %661
  %664 = vset.pattern.permute.xlu0 0
  %665 = vperm.xlu0 %664, %v646
  %v666 = vpop.permute.xlu0 %665
  %668 = vset.pattern.permute.xlu0 0
  %669 = vperm.xlu0 %668, %v647
  %v670 = vpop.permute.xlu0 %669
  %672 = vset.pattern.permute.xlu0 0
  %673 = vperm.xlu0 %672, %v648
  %v674 = vpop.permute.xlu0 %673
  %v676 = vsel %vm236, %v636, 0
  %v679 = vsel %vm236, %v637, 0
  %v682 = vsel %vm236, %v638, 0
  %v685 = vsel %vm236, %v639, 0
  %v688 = vsel %vm236, %v640, 0
  %v691 = vsel %vm236, %v641, 0
  %693 = vmatpush.msra.mxu0 0.0
  %694 = vmatpush.msra.mxu0 0.0
  %695 = vmatpush.msra.mxu0 0.0
  %696 = vmatpush.msra.mxu0 0.0
  %697 = vmatpush.msra.mxu0 0.0
  %698 = vmatpush.msra.mxu0 0.0
  %699 = vmatpush.msra.mxu0 0.0
  %700 = vmatpush.msra.mxu0 0.0
  %701 = vmatpush.msra.mxu0 0.0
  %702 = vmatpush.msra.mxu0 0.0
  %703 = vmatpush.msra.mxu0 %v634
  %704 = vmatpush.msra.mxu0 %v633
  %705 = vmatpush.msra.mxu0 %v632
  %706 = vmatpush.msra.mxu0 %v631
  %707 = vmatpush.msra.mxu0 %v630
  %708 = vmatpush.msra.mxu0 %v629
  %709 = vmatmul.f32.gmra.mxu0 %v676
  %v710 = vpop.f32.mrf.mxu0
  %v711 = vadd.f32 %v652, %v710
  %712 = vmatmul.f32.gmra.mxu0 %v679
  %v713 = vpop.f32.mrf.mxu0
  %v714 = vadd.f32 %v657, %v713
  %715 = vmatmul.f32.gmra.mxu0 %v682
  %v716 = vpop.f32.mrf.mxu0
  %717 = vmatmul.f32.gmra.mxu0 %v685
  %v718 = vpop.f32.mrf.mxu0
  %719 = vmatmul.f32.gmra.mxu0 %v688
  %v720 = vpop.f32.mrf.mxu0
  %721 = vmatmul.f32.gmra.mxu0 %v691
  %v722 = vpop.f32.mrf.mxu0
  %723 = vdwg.mxu0
  %724 = vxpose.xlu0.b32.start [1/16] %v711, 128
  %725 = vxpose.xlu0.b32.cont [2/16] %v714, 128
  %726 = vxpose.xlu0.b32.cont [3/16] 0.0, 128
  %727 = vxpose.xlu0.b32.cont [4/16] 0.0, 128
  %728 = vxpose.xlu0.b32.cont [5/16] 0.0, 128
  %729 = vxpose.xlu0.b32.cont [6/16] 0.0, 128
  %730 = vxpose.xlu0.b32.cont [7/16] 0.0, 128
  %731 = vxpose.xlu0.b32.cont [8/16] 0.0, 128
  %732 = vxpose.xlu0.b32.cont [9/16] 0.0, 128
  %733 = vxpose.xlu0.b32.cont [10/16] 0.0, 128
  %734 = vxpose.xlu0.b32.cont [11/16] 0.0, 128
  %735 = vxpose.xlu0.b32.cont [12/16] 0.0, 128
  %736 = vxpose.xlu0.b32.cont [13/16] 0.0, 128
  %737 = vxpose.xlu0.b32.cont [14/16] 0.0, 128
  %738 = vxpose.xlu0.b32.cont [15/16] 0.0, 128
  %739 = vxpose.xlu0.b32.end [16/16] 0.0, 128
  %v740 = vpop.trf.xlu0
  %v741 = vpop.trf.xlu0
  %v742 = vpop.trf.xlu0
  %v743 = vpop.trf.xlu0
  %v744 = vpop.trf.xlu0
  %v745 = vpop.trf.xlu0
  %v746 = vpop.trf.xlu0
  %v747 = vpop.trf.xlu0
  %v748 = vpop.trf.xlu0
  %v749 = vpop.trf.xlu0
  %v750 = vpop.trf.xlu0
  %v751 = vpop.trf.xlu0
  %v752 = vpop.trf.xlu0
  %v753 = vpop.trf.xlu0
  %v754 = vpop.trf.xlu0
  %v755 = vpop.trf.xlu0
  %756 = vst.msk [vmem:[%s3] sm:$0xff] %vm72, %v740
  %757 = vst.msk [vmem:[%s3 + $0x8] sm:$0xff] %vm72, %v741
  %758 = vst.msk [vmem:[%s3 + $0x10] sm:$0xff] %vm72, %v742
  %759 = vst.msk [vmem:[%s3 + $0x18] sm:$0xff] %vm72, %v743
  %760 = vst.msk [vmem:[%s3 + $0x20] sm:$0xff] %vm72, %v744
  %761 = vst.msk [vmem:[%s3 + $0x28] sm:$0xff] %vm72, %v745
  %762 = vst.msk [vmem:[%s3 + $0x30] sm:$0xff] %vm72, %v746
  %763 = vst.msk [vmem:[%s3 + $0x38] sm:$0xff] %vm72, %v747
  %764 = vst.msk [vmem:[%s3 + $0x40] sm:$0xff] %vm72, %v748
  %765 = vst.msk [vmem:[%s3 + $0x48] sm:$0xff] %vm72, %v749
  %766 = vst.msk [vmem:[%s3 + $0x50] sm:$0xff] %vm72, %v750
  %767 = vst.msk [vmem:[%s3 + $0x58] sm:$0xff] %vm72, %v751
  %768 = vst.msk [vmem:[%s3 + $0x60] sm:$0xff] %vm72, %v752
  %769 = vst.msk [vmem:[%s3 + $0x68] sm:$0xff] %vm72, %v753
  %770 = vst.msk [vmem:[%s3 + $0x70] sm:$0xff] %vm72, %v754
  %771 = vst.msk [vmem:[%s3 + $0x78] sm:$0xff] %vm72, %v755
  // Predicated region
  $region14: #{tpu_custom_call.1} parent=0 // pred_check
    _
  $region15: #{tpu_custom_call.1} parent=0 // pred_check_branch
    %773 = sbr.rel (0) target = $region17
  $region16: #{tpu_custom_call.1} parent=0 // pred_region
    _
  $region17: #{tpu_custom_call.1} parent=0 // pred_fallthru
    _
  // Predicated region
  $region18: #{tpu_custom_call.1} parent=0 // pred_check
    _
  $region19: #{tpu_custom_call.1} parent=0 // pred_check_branch
    %775 = sbr.rel (0) target = $region21
  $region20: #{tpu_custom_call.1} parent=0 // pred_region
    _
  $region21: #{tpu_custom_call.1} parent=0 // pred_fallthru
    _

</llo_original>
